<compile_context>
chip_gen: v6e
topology: v6e:2x2x1
jax: 0.10.0
libtpu: 0.0.40
codegen_flags: <defaults>
</compile_context>

<pallas_src>
import functools
import math

import jax
import jax.numpy as jnp
from jax.experimental import pallas as pl
from jax.experimental.pallas import tpu as pltpu

EPS = 1e-5           # GPT-2 layer_norm_epsilon and TransformerEncoderLayer default.
NEG_BIG = -1e30      # causal/pad mask fill (f32 softmax path everywhere).

_VMEM = pl.BlockSpec(memory_space=pltpu.MemorySpace.VMEM)


def _round_up(x, m):
    return ((x + m - 1) // m) * m


def _pad2(x, rows, cols):
    r, c = x.shape
    if r == rows and c == cols:
        return x
    return jnp.pad(x, ((0, rows - r), (0, cols - c)))


@functools.lru_cache(maxsize=None)
def _gen_caps():
    """Generation-gated tile caps / VMEM budget.

    v5e/v6e have 128 MiB VMEM per TensorCore -> big tiles and a ~96 MiB scoped
    budget; v7x has only 64 MiB -> smaller tiles and a ~48 MiB budget so
    double-buffered inputs + weights + acc scratch still fit.
    """
    vmem = 64 * 1024 * 1024
    try:
        info = pltpu.get_tpu_info()
        vmem = int(getattr(info, "vmem_capacity_bytes", vmem) or vmem)
    except Exception:
        pass
    if vmem >= 100 * 1024 * 1024:        # v5e / v6e
        return {"tm": 512, "tn": 512, "tk": 1024,
                "vmem_limit": 96 * 1024 * 1024}
    # v7x (or unknown): conservative.
    return {"tm": 256, "tn": 384, "tk": 512,
            "vmem_limit": 48 * 1024 * 1024}


# ------------------------- tiled fused linear kernel -------------------------

def _make_linear_kernel(*, activation, fuse_ln, ln_out, has_residual, k_steps):
    """y = [LN](x) @ w + b [+ residual] [activation], tiled over (M, N, K).

    MXU is fed bf16 operands; the accumulator and epilogue are f32.  With
    ln_out=True the normalized input is emitted as a second output (so the
    post-norm encoder residual never needs a standalone LayerNorm pass).
    """

    def kernel(*refs):
        idx = 0
        x_ref = refs[idx]; idx += 1
        if fuse_ln:
            g_ref, bln_ref = refs[idx], refs[idx + 1]; idx += 2
        w_ref, b_ref = refs[idx], refs[idx + 1]; idx += 2
        if has_residual:
            r_ref = refs[idx]; idx += 1
        o_ref = refs[idx]; idx += 1
        if ln_out:
            xn_ref = refs[idx]; idx += 1
        acc_ref = refs[idx]

        k = pl.program_id(2)

        @pl.when(k == 0)
        def _():
            acc_ref[...] = jnp.zeros_like(acc_ref)

        x = x_ref[...].astype(jnp.float32)
        if fuse_ln:
            # LN fusion requires the full K row in one block (k_steps == 1).
            # NOTE: mean/var are recomputed per N-tile j; cheap filler under
            # the MXU for these sizes.
            mu = jnp.mean(x, axis=-1, keepdims=True)
            var = jnp.mean(jnp.square(x - mu), axis=-1, keepdims=True)
            x = (x - mu) * jax.lax.rsqrt(var + EPS) * g_ref[...] + bln_ref[...]
            if ln_out:
                xn_ref[...] = x.astype(xn_ref.dtype)

        acc_ref[...] += jnp.dot(x.astype(jnp.bfloat16),
                                w_ref[...].astype(jnp.bfloat16),
                                preferred_element_type=jnp.float32)

        @pl.when(k == k_steps - 1)
        def _():
            y = acc_ref[...] + b_ref[...]
            if has_residual:
                y = y + r_ref[...]
            if activation == "relu":
                y = jnp.maximum(y, 0.0)
            elif activation == "gelu":  # GPT-2 "gelu_new" (tanh approximation)
                c = math.sqrt(2.0 / math.pi)
                y = 0.5 * y * (1.0 + jnp.tanh(c * (y + 0.044715 * y * y * y)))
            o_ref[...] = y.astype(o_ref.dtype)

    return kernel


def pallas_linear(x, w, b, *, activation="none", ln=None, residual=None,
                  ln_out=False):
    """x: (M, K) f32, w: (K, N) [stored bf16], b: (1, N) -> (M, N) f32.

    ln=(gamma, beta) fuses a pre-LayerNorm on x.  residual is added in the
    epilogue.  ln_out=True additionally returns LN(x) as a second array.
    Operands are zero-padded to tile multiples and results sliced back.
    """
    M, K = x.shape
    _, N = w.shape
    fuse_ln = ln is not None
    assert not ln_out or fuse_ln
    has_res = residual is not None
    caps = _gen_caps()

    tm = min(_round_up(M, 8), caps["tm"])
    tn = min(_round_up(N, 128), caps["tn"])
    if fuse_ln:
        tk, kp = K, K                       # LN needs the whole feature row.
    else:
        tk = min(_round_up(K, 128), caps["tk"])
        kp = _round_up(K, tk)
    mp = _round_up(M, tm)
    np_ = _round_up(N, tn)
    k_steps = kp // tk

    xp = _pad2(x, mp, kp)
    wp = _pad2(w.astype(jnp.bfloat16), kp, np_)     # bf16 weight streaming
    bp = _pad2(b.astype(jnp.float32), 1, np_)

    inputs = [xp]
    in_specs = [pl.BlockSpec((tm, tk), lambda i, j, k: (i, k))]
    if fuse_ln:
        g, bln = ln
        inputs += [g.astype(jnp.float32), bln.astype(jnp.float32)]
        in_specs += [pl.BlockSpec((1, tk), lambda i, j, k: (0, k)),
                     pl.BlockSpec((1, tk), lambda i, j, k: (0, k))]
    inputs += [wp, bp]
    in_specs += [pl.BlockSpec((tk, tn), lambda i, j, k: (k, j)),
                 pl.BlockSpec((1, tn), lambda i, j, k: (0, j))]
    if has_res:
        inputs.append(_pad2(residual, mp, np_))
        in_specs.append(pl.BlockSpec((tm, tn), lambda i, j, k: (i, j)))

    out_shapes = [jax.ShapeDtypeStruct((mp, np_), jnp.float32)]
    out_specs = [pl.BlockSpec((tm, tn), lambda i, j, k: (i, j))]
    if ln_out:
        out_shapes.append(jax.ShapeDtypeStruct((mp, kp), jnp.float32))
        out_specs.append(pl.BlockSpec((tm, kp), lambda i, j, k: (i, 0)))

    # The ln_out block is revisited across the j axis, so keep j sequential
    # in that case (avoids a megacore write race on the shared block).
    dims = ("parallel", "arbitrary" if ln_out else "parallel", "arbitrary")

    kernel = _make_linear_kernel(activation=activation, fuse_ln=fuse_ln,
                                 ln_out=ln_out, has_residual=has_res,
                                 k_steps=k_steps)
    res = pl.pallas_call(
        kernel,
        out_shape=tuple(out_shapes) if ln_out else out_shapes[0],
        grid=(mp // tm, np_ // tn, k_steps),
        in_specs=in_specs,
        out_specs=out_specs if ln_out else out_specs[0],
        scratch_shapes=[pltpu.VMEM((tm, tn), jnp.float32)],
        compiler_params=pltpu.CompilerParams(
            dimension_semantics=dims,
            vmem_limit_bytes=caps["vmem_limit"]),
        cost_estimate=pl.CostEstimate(
            flops=2 * mp * np_ * kp,
            transcendentals=mp * np_ if activation == "gelu" else 0,
            bytes_accessed=4 * mp * kp + 2 * kp * np_ + 8 * mp * np_),
    )(*inputs)

    if ln_out:
        y, xn = res
        if mp != M or np_ != N:
            y = y[:M, :N]
        if mp != M:
            xn = xn[:M, :]
        return y, xn
    out = res
    if mp != M or np_ != N:
        out = out[:M, :N]
    return out


# ------------------------------ layernorm kernel -----------------------------

def _layernorm_kernel(x_ref, g_ref, b_ref, o_ref):
    x = x_ref[...].astype(jnp.float32)
    mu = jnp.mean(x, axis=-1, keepdims=True)
    var = jnp.mean(jnp.square(x - mu), axis=-1, keepdims=True)
    o_ref[...] = ((x - mu) * jax.lax.rsqrt(var + EPS) * g_ref[...]
                  + b_ref[...]).astype(o_ref.dtype)


def pallas_layernorm(x, g, b):
    M, D = x.shape
    tm = min(_round_up(M, 8), 512)
    mp = _round_up(M, tm)
    xp = _pad2(x, mp, D)
    out = pl.pallas_call(
        _layernorm_kernel,
        out_shape=jax.ShapeDtypeStruct((mp, D), jnp.float32),
        grid=(mp // tm,),
        in_specs=[pl.BlockSpec((tm, D), lambda i: (i, 0)),
                  pl.BlockSpec((1, D), lambda i: (0, 0)),
                  pl.BlockSpec((1, D), lambda i: (0, 0))],
        out_specs=pl.BlockSpec((tm, D), lambda i: (i, 0)),
        compiler_params=pltpu.CompilerParams(
            dimension_semantics=("parallel",)),
    )(xp, g, b)
    return out[:M] if mp != M else out


# --------------------------- flash attention kernel --------------------------

def _make_flash_kernel(*, causal, scale, tq, tkv, s_valid, n_kv):
    def kernel(q_ref, k_ref, v_ref, o_ref, m_sc, l_sc, acc_sc):
        qi = pl.program_id(1)
        ki = pl.program_id(2)

        @pl.when(ki == 0)
        def _():
            m_sc[...] = jnp.full_like(m_sc, -jnp.inf)
            l_sc[...] = jnp.zeros_like(l_sc)
            acc_sc[...] = jnp.zeros_like(acc_sc)

        def compute():
            # bf16 MXU feed, f32 accumulation + softmax statistics.
            q = q_ref[...].astype(jnp.bfloat16)
            k = k_ref[...].astype(jnp.bfloat16)
            s = jax.lax.dot_general(q, k, (((1,), (1,)), ((), ())),
                                    preferred_element_type=jnp.float32) * scale
            col = ki * tkv + jax.lax.broadcasted_iota(jnp.int32, (tq, tkv), 1)
            valid = col < s_valid                      # mask zero-padded keys
            if causal:
                row = qi * tq + jax.lax.broadcasted_iota(jnp.int32, (tq, tkv), 0)
                valid = jnp.logical_and(valid, col <= row)
            s = jnp.where(valid, s, NEG_BIG)

            m_prev = m_sc[...]
            m_new = jnp.maximum(m_prev, jnp.max(s, axis=-1, keepdims=True))
            alpha = jnp.exp(m_prev - m_new)
            p = jnp.exp(s - m_new)
            l_sc[...] = alpha * l_sc[...] + jnp.sum(p, axis=-1, keepdims=True)
            acc_sc[...] = alpha * acc_sc[...] + jnp.dot(
                p.astype(jnp.bfloat16), v_ref[...].astype(jnp.bfloat16),
                preferred_element_type=jnp.float32)
            m_sc[...] = m_new

        if causal:
            # Skip kv blocks entirely above the diagonal (compute skipped; the
            # BlockSpec pipeline still prefetches them).
            # TODO(synk): for very long S move the kv loop in-kernel with a
            # manual double-buffered make_async_copy so skipped blocks are
            # never fetched from HBM.
            @pl.when(ki * tkv <= qi * tq + (tq - 1))
            def _():
                compute()
        else:
            compute()

        @pl.when(ki == n_kv - 1)
        def _():
            o_ref[...] = (acc_sc[...] *
                          pl.reciprocal(l_sc[...], approx=True)
                          ).astype(o_ref.dtype)

    return kernel


def pallas_flash_attention(q, k, v, *, causal, scale):
    """q, k, v: (B*heads, S, head_dim) -> (B*heads, S, head_dim)."""
    BH, S, dh = q.shape
    tq = min(_round_up(S, 8), 256)
    sp = _round_up(S, tq)
    if sp <= 2048:
        tkv = sp           # whole (padded) kv sequence per step: 1 kv grid step
    else:
        tkv = 1024
        sp = _round_up(sp, tkv)
    if sp != S:
        pad = ((0, 0), (0, sp - S), (0, 0))
        q, k, v = jnp.pad(q, pad), jnp.pad(k, pad), jnp.pad(v, pad)
    n_q, n_kv = sp // tq, sp // tkv

    # TODO(synk): with dh < 128 the o_ref stores are lane-masked; packing 2
    # heads per grid point (2*dh lanes) would make them dense.
    kernel = _make_flash_kernel(causal=causal, scale=scale, tq=tq, tkv=tkv,
                                s_valid=S, n_kv=n_kv)
    out = pl.pallas_call(
        kernel,
        out_shape=jax.ShapeDtypeStruct((BH, sp, dh), jnp.float32),
        grid=(BH, n_q, n_kv),
        in_specs=[pl.BlockSpec((pl.Squeezed(), tq, dh),
                               lambda b, qi, ki: (b, qi, 0)),
                  pl.BlockSpec((pl.Squeezed(), tkv, dh),
                               lambda b, qi, ki: (b, ki, 0)),
                  pl.BlockSpec((pl.Squeezed(), tkv, dh),
                               lambda b, qi, ki: (b, ki, 0))],
        out_specs=pl.BlockSpec((pl.Squeezed(), tq, dh),
                               lambda b, qi, ki: (b, qi, 0)),
        scratch_shapes=[pltpu.VMEM((tq, 1), jnp.float32),
                        pltpu.VMEM((tq, 1), jnp.float32),
                        pltpu.VMEM((tq, dh), jnp.float32)],
        compiler_params=pltpu.CompilerParams(
            dimension_semantics=("parallel", "parallel", "arbitrary"),
            vmem_limit_bytes=_gen_caps()["vmem_limit"]),
        cost_estimate=pl.CostEstimate(
            flops=4 * BH * sp * sp * dh,
            transcendentals=BH * sp * sp,
            bytes_accessed=4 * 4 * BH * sp * dh),
    )(q, k, v)
    if sp != S:
        out = out[:, :S, :]
    return out


# --------------------------------- LSTM kernels ------------------------------

def _lstm_cell(gates, c_prev, H):
    """PyTorch gate order i, f, g, o."""
    i = jax.nn.sigmoid(gates[:, 0 * H:1 * H])
    f = jax.nn.sigmoid(gates[:, 1 * H:2 * H])
    g = jnp.tanh(gates[:, 2 * H:3 * H])
    o = jax.nn.sigmoid(gates[:, 3 * H:4 * H])
    c = f * c_prev + i * g
    h = o * jnp.tanh(c)
    return h, c


def _lstm_resident_kernel(xg_ref, whh_ref, o_ref, h_sc, c_sc, *, T):
    """Whole sequence resident in VMEM; fori_loop with modest unroll."""
    # TODO(synk): no grid here -> single TensorCore on v7x; add a parallel
    # batch-block axis when B is large enough to split.
    H = h_sc.shape[-1]
    h_sc[...] = jnp.zeros_like(h_sc)
    c_sc[...] = jnp.zeros_like(c_sc)
    whh = whh_ref[...].astype(jnp.bfloat16)

    def step(t, carry):
        gates = xg_ref[t] + jnp.dot(h_sc[...].astype(jnp.bfloat16), whh,
                                    preferred_element_type=jnp.float32)
        h, c = _lstm_cell(gates, c_sc[...], H)
        h_sc[...] = h
        c_sc[...] = c
        o_ref[t] = h.astype(o_ref.dtype)
        return carry

    jax.lax.fori_loop(0, T, step, 0, unroll=min(8, max(T, 1)))


def _lstm_block_kernel(xg_ref, whh_ref, o_ref, h_sc, c_sc, *, tb):
    """tb timesteps per grid point; (h, c) carried in VMEM scratch.

    NOTE: the time grid axis MUST stay "arbitrary" (sequential).
    """
    @pl.when(pl.program_id(0) == 0)
    def _():
        h_sc[...] = jnp.zeros_like(h_sc)
        c_sc[...] = jnp.zeros_like(c_sc)

    H = h_sc.shape[-1]
    whh = whh_ref[...].astype(jnp.bfloat16)

    def step(i, carry):
        gates = xg_ref[i] + jnp.dot(h_sc[...].astype(jnp.bfloat16), whh,
                                    preferred_element_type=jnp.float32)
        h, c = _lstm_cell(gates, c_sc[...], H)
        h_sc[...] = h
        c_sc[...] = c
        o_ref[i] = h.astype(o_ref.dtype)
        return carry

    jax.lax.fori_loop(0, tb, step, 0, unroll=True)


def pallas_lstm(x_gates_tbg, w_hh):
    """x_gates_tbg: (T, B, 4H) precomputed x-side gates; w_hh: (H, 4H)."""
    T, B, G = x_gates_tbg.shape
    H = G // 4
    resident_bytes = (T * B * G + T * B * H) * 4
    if resident_bytes <= 8 * 1024 * 1024 and T <= 512:
        return pl.pallas_call(
            functools.partial(_lstm_resident_kernel, T=T),
            out_shape=jax.ShapeDtypeStruct((T, B, H), jnp.float32),
            in_specs=[_VMEM, _VMEM],
            out_specs=_VMEM,
            scratch_shapes=[pltpu.VMEM((B, H), jnp.float32),
                            pltpu.VMEM((B, H), jnp.float32)],
        )(x_gates_tbg, w_hh)

    # Fallback for long sequences: blocks of timesteps per grid point.
    tb = 16
    tp = _round_up(T, tb)
    if tp != T:
        x_gates_tbg = jnp.pad(x_gates_tbg, ((0, tp - T), (0, 0), (0, 0)))
    out = pl.pallas_call(
        functools.partial(_lstm_block_kernel, tb=tb),
        out_shape=jax.ShapeDtypeStruct((tp, B, H), jnp.float32),
        grid=(tp // tb,),
        in_specs=[pl.BlockSpec((tb, B, G), lambda t: (t, 0, 0)),
                  pl.BlockSpec((H, G), lambda t: (0, 0))],
        out_specs=pl.BlockSpec((tb, B, H), lambda t: (t, 0, 0)),
        scratch_shapes=[pltpu.VMEM((B, H), jnp.float32),
                        pltpu.VMEM((B, H), jnp.float32)],
        compiler_params=pltpu.CompilerParams(
            dimension_semantics=("arbitrary",)),
    )(x_gates_tbg, w_hh)
    return out[:T] if tp != T else out


# ------------------------------- model forward -------------------------------

def _split_qkv_heads(qkv_flat, B, S, nh):
    """(B*S, 3*d) -> three (B*nh, S, dh) arrays with ONE XLA transpose.

    TODO(synk): a BlockSpec-level head gather would avoid the transpose
    entirely, but dh < 128 blocks on the packed (3, nh, dh) axis are not
    lane-tile friendly, so the single transpose is kept.
    """
    d3 = qkv_flat.shape[-1]
    d = d3 // 3
    dh = d // nh
    qkv = qkv_flat.reshape(B, S, 3, nh, dh).transpose(2, 0, 3, 1, 4)
    qkv = qkv.reshape(3, B * nh, S, dh)
    return qkv[0], qkv[1], qkv[2]


def _merge_heads(x_bh, B, S, nh):
    dh = x_bh.shape[-1]
    return x_bh.reshape(B, nh, S, dh).transpose(0, 2, 1, 3).reshape(B * S, nh * dh)


def gpt2ts_forward(params, tokens):
    """GPT2TS.forward (eval mode: nn.Dropout == identity)."""
    B, S = tokens.shape
    d = params["wte"].shape[1]
    nh_gpt = params["gpt_heads"]
    nh_enc = params["enc_heads"]

    # --------- GPT-2 backbone: wte + wpe, causal pre-norm blocks -------------
    h = jnp.take(params["wte"], tokens, axis=0) + params["wpe"][:S][None, :, :]
    x = h.reshape(B * S, d)
    for lp in params["gpt_layers"]:
        dh = d // nh_gpt
        qkv = pallas_linear(x, lp["qkv_w"], lp["qkv_b"],
                            ln=(lp["ln1_g"], lp["ln1_b"]))      # LN1 fused
        q, k, v = _split_qkv_heads(qkv, B, S, nh_gpt)
        a = pallas_flash_attention(q, k, v, causal=True,
                                   scale=1.0 / math.sqrt(dh))
        x = pallas_linear(_merge_heads(a, B, S, nh_gpt),
                          lp["proj_w"], lp["proj_b"], residual=x)  # +residual
        m = pallas_linear(x, lp["fc_w"], lp["fc_b"], activation="gelu",
                          ln=(lp["ln2_g"], lp["ln2_b"]))          # LN2 fused
        x = pallas_linear(m, lp["mproj_w"], lp["mproj_b"], residual=x)

    # --- nn.TransformerEncoder (post-norm, non-causal MHA, ReLU FFN) ---------
    # GPT-2 ln_f and every encoder norm2 are fused into the next layer's
    # in-proj (ln_out=True returns the normalized activation for the residual);
    # norm1 is fused into linear1 the same way.  Only the very last norm runs
    # as a standalone LayerNorm pass.
    pre = x                                   # pre-norm activation
    ln_g, ln_b = params["lnf_g"], params["lnf_b"]
    for lp in params["enc_layers"]:
        dh = d // nh_enc
        qkv, xin = pallas_linear(pre, lp["in_w"], lp["in_b"],
                                 ln=(ln_g, ln_b), ln_out=True)
        q, k, v = _split_qkv_heads(qkv, B, S, nh_enc)
        a = pallas_flash_attention(q, k, v, causal=False,
                                   scale=1.0 / math.sqrt(dh))
        src = pallas_linear(_merge_heads(a, B, S, nh_enc),
                            lp["out_w"], lp["out_b"], residual=xin)
        f, x1 = pallas_linear(src, lp["l1_w"], lp["l1_b"], activation="relu",
                              ln=(lp["ln1_g"], lp["ln1_b"]), ln_out=True)
        pre = pallas_linear(f, lp["l2_w"], lp["l2_b"], residual=x1)
        ln_g, ln_b = lp["ln2_g"], lp["ln2_b"]
    trans_flat = pallas_layernorm(pre, ln_g, ln_b)        # final norm, (B*S, d)

    # ------------------------------ gloss heads (stacked) --------------------
    V = params["vocab_size"]
    gloss_names = list(params["gloss_heads"].keys())
    gw = jnp.concatenate([params["gloss_heads"][g][0] for g in gloss_names], 1)
    gb = jnp.concatenate([params["gloss_heads"][g][1] for g in gloss_names], 1)
    gl = pallas_linear(trans_flat, gw, gb)                 # (B*S, n_gloss*V)
    gloss_logits = {name: gl[:, i * V:(i + 1) * V].reshape(B, S, V)
                    for i, name in enumerate(gloss_names)}

    # ------------------------------ frame LSTM -------------------------------
    # TODO(synk): single-layer LSTM modeled (configs.lstm_layers > 1 would loop).
    H = params["lstm_hidden"]
    x_gates = pallas_linear(trans_flat, params["lstm_w_ih"], params["lstm_b"])
    x_gates = x_gates.reshape(B, S, 4 * H).transpose(1, 0, 2)   # time-major
    lstm_out = pallas_lstm(x_gates, params["lstm_w_hh"])        # (S, B, H)
    lstm_flat = lstm_out.transpose(1, 0, 2).reshape(B * S, H)

    # ------------------------ output heads (stacked, lane-dense) -------------
    bool_names = list(params["bool_heads"].keys())
    infl_names = list(params["infl_heads"].keys())
    head_ws = ([params["frame_head"][0]]
               + [params["bool_heads"][f][0] for f in bool_names]
               + [params["infl_heads"][f][0] for f in infl_names])
    head_bs = ([params["frame_head"][1]]
               + [params["bool_heads"][f][1] for f in bool_names]
               + [params["infl_heads"][f][1] for f in infl_names])
    heads = pallas_linear(lstm_flat, jnp.concatenate(head_ws, 1),
                          jnp.concatenate(head_bs, 1))      # (B*S, 1+5*nb+ni)
    framestart = heads[:, 0].reshape(B, S)                  # squeeze(-1)
    boolean_outputs = {
        name: heads[:, 1 + 5 * i:1 + 5 * (i + 1)].reshape(B, S, 5)
        for i, name in enumerate(bool_names)}
    off = 1 + 5 * len(bool_names)
    inflection_outputs = {
        name: heads[:, off + i].reshape(B, S)               # squeeze(-1)
        for i, name in enumerate(infl_names)}
    return gloss_logits, framestart, boolean_outputs, inflection_outputs


# ---------------------------- deterministic params ---------------------------

def init_params(key, *, vocab_size, d_model, max_pos, gpt_layers, gpt_heads,
                enc_layers, enc_heads, lstm_hidden,
                gloss_features, boolean_features, inflection_features):
    # TODO(synk): synthetic deterministic init; the original loads pretrained
    # GPT-2 weights which we do not reproduce here.
    keys = iter(jax.random.split(key, 256))

    def nrm(shape):
        return 0.02 * jax.random.normal(next(keys), shape, jnp.float32)

    def linear(in_f, out_f):
        # Matmul weights stored bf16 in HBM (streamed to the MXU as bf16 with
        # f32 accumulation); biases stay f32.
        return nrm((in_f, out_f)).astype(jnp.bfloat16), nrm((1, out_f))

    def ln(dim):
        return jnp.ones((1, dim), jnp.float32), jnp.zeros((1, dim), jnp.float32)

    d = d_model
    params = dict(vocab_size=vocab_size, gpt_heads=gpt_heads,
                  enc_heads=enc_heads, lstm_hidden=lstm_hidden,
                  wte=nrm((vocab_size, d)), wpe=nrm((max_pos, d)))

    gls = []
    for _ in range(gpt_layers):
        qkv_w, qkv_b = linear(d, 3 * d)
        proj_w, proj_b = linear(d, d)
        fc_w, fc_b = linear(d, 4 * d)
        mproj_w, mproj_b = linear(4 * d, d)
        ln1_g, ln1_b = ln(d)
        ln2_g, ln2_b = ln(d)
        gls.append(dict(qkv_w=qkv_w, qkv_b=qkv_b, proj_w=proj_w, proj_b=proj_b,
                        fc_w=fc_w, fc_b=fc_b, mproj_w=mproj_w, mproj_b=mproj_b,
                        ln1_g=ln1_g, ln1_b=ln1_b, ln2_g=ln2_g, ln2_b=ln2_b))
    params["gpt_layers"] = gls
    params["lnf_g"], params["lnf_b"] = ln(d)

    els = []
    for _ in range(enc_layers):
        in_w, in_b = linear(d, 3 * d)
        out_w, out_b = linear(d, d)
        l1_w, l1_b = linear(d, 4 * d)
        l2_w, l2_b = linear(4 * d, d)
        ln1_g, ln1_b = ln(d)
        ln2_g, ln2_b = ln(d)
        els.append(dict(in_w=in_w, in_b=in_b, out_w=out_w, out_b=out_b,
                        l1_w=l1_w, l1_b=l1_b, l2_w=l2_w, l2_b=l2_b,
                        ln1_g=ln1_g, ln1_b=ln1_b, ln2_g=ln2_g, ln2_b=ln2_b))
    params["enc_layers"] = els

    # Single-layer batch_first LSTM; b = b_ih + b_hh folded into one bias.
    params["lstm_w_ih"], params["lstm_b"] = linear(d, 4 * lstm_hidden)
    params["lstm_w_hh"] = nrm((lstm_hidden, 4 * lstm_hidden)).astype(jnp.bfloat16)

    params["gloss_heads"] = {g: linear(d, vocab_size) for g in gloss_features}
    params["frame_head"] = linear(lstm_hidden, 1)
    params["bool_heads"] = {f: linear(lstm_hidden, 5) for f in boolean_features}
    params["infl_heads"] = {f: linear(lstm_hidden, 1)
                            for f in inflection_features}
    return params


if __name__ == "__main__":
    # ---------------- micro correctness checks (bf16-loose tolerances) -------
    ck = jax.random.PRNGKey(2)
    k1, k2, k3, k4, k5 = jax.random.split(ck, 5)
    xm = jax.random.normal(k1, (24, 48), jnp.float32)
    wm = jax.random.normal(k2, (48, 96), jnp.float32) * 0.1
    bm = jax.random.normal(k3, (1, 96), jnp.float32) * 0.1
    rm = jax.random.normal(k4, (24, 96), jnp.float32)
    gm = jnp.full((1, 48), 1.3, jnp.float32)
    betam = jnp.full((1, 48), 0.1, jnp.float32)
    y, xn = pallas_linear(xm, wm, bm, activation="relu", ln=(gm, betam),
                          residual=rm, ln_out=True)
    mu = jnp.mean(xm, axis=-1, keepdims=True)
    var = jnp.var(xm, axis=-1, keepdims=True)
    xn_ref = (xm - mu) * jax.lax.rsqrt(var + EPS) * gm + betam
    y_ref = jnp.maximum(xn_ref @ wm + bm + rm, 0.0)
    assert bool(jnp.allclose(xn, xn_ref, atol=5e-2, rtol=5e-2))
    assert bool(jnp.allclose(y, y_ref, atol=5e-2, rtol=5e-2))

    kq, kk, kv = jax.random.split(k5, 3)
    qa = jax.random.normal(kq, (4, 16, 8), jnp.float32)
    ka = jax.random.normal(kk, (4, 16, 8), jnp.float32)
    va = jax.random.normal(kv, (4, 16, 8), jnp.float32)
    oa = pallas_flash_attention(qa, ka, va, causal=True,
                                scale=1.0 / math.sqrt(8))
    sc = jnp.einsum("bqd,bkd->bqk", qa, ka) / math.sqrt(8)
    msk = jnp.tril(jnp.ones((16, 16), bool))
    sc = jnp.where(msk[None], sc, -jnp.inf)
    oa_ref = jnp.einsum("bqk,bkd->bqd", jax.nn.softmax(sc, axis=-1), va)
    assert bool(jnp.allclose(oa, oa_ref, atol=5e-2, rtol=5e-2))

    # ----------------------------- full model --------------------------------
    B, S = 2, 8
    vocab_size = 50
    d_model = 32
    gloss_features = ["lemma", "sense"]
    boolean_features = ["negation"]
    inflection_features = ["tense"]

    key = jax.random.PRNGKey(0)
    pkey, tkey = jax.random.split(key)
    params = init_params(
        pkey, vocab_size=vocab_size, d_model=d_model, max_pos=16,
        gpt_layers=2, gpt_heads=4, enc_layers=1, enc_heads=4, lstm_hidden=16,
        gloss_features=gloss_features, boolean_features=boolean_features,
        inflection_features=inflection_features)
    text_tokens = jax.random.randint(tkey, (B, S), 0, vocab_size,
                                     dtype=jnp.int32)

    outputs = gpt2ts_forward(params, text_tokens)
    outputs = jax.block_until_ready(outputs)

    gloss_logits, framestart, boolean_outputs, inflection_outputs = outputs
    assert gloss_logits["lemma"].shape == (B, S, vocab_size)
    assert gloss_logits["sense"].shape == (B, S, vocab_size)
    assert framestart.shape == (B, S)
    assert boolean_outputs["negation"].shape == (B, S, 5)
    assert inflection_outputs["tense"].shape == (B, S)
    assert all(bool(jnp.all(jnp.isfinite(v))) for v in
               [gloss_logits["lemma"], gloss_logits["sense"], framestart,
                boolean_outputs["negation"], inflection_outputs["tense"]])
    print("KERNEL_OK")
</pallas_src>

<mosaic_0001>
module attributes {stable_mosaic.version = 11 : i64} {
  func.func @kernel(%arg0: i32, %arg1: i32, %arg2: i32, %arg3: memref<24x48xf32, #tpu.memory_space<vmem>>, %arg4: memref<1x48xf32, #tpu.memory_space<vmem>>, %arg5: memref<1x48xf32, #tpu.memory_space<vmem>>, %arg6: memref<48x128xbf16, #tpu.memory_space<vmem>>, %arg7: memref<1x128xf32, #tpu.memory_space<vmem>>, %arg8: memref<24x128xf32, #tpu.memory_space<vmem>>, %arg9: memref<24x128xf32, #tpu.memory_space<vmem>>, %arg10: memref<24x48xf32, #tpu.memory_space<vmem>>, %arg11: memref<24x128xf32, #tpu.memory_space<vmem>>) attributes {dimension_semantics = [#tpu.dimension_semantics<parallel>, #tpu.dimension_semantics<arbitrary>, #tpu.dimension_semantics<arbitrary>], iteration_bounds = array<i64: 1, 1, 1>, scalar_prefetch = 0 : i64, scratch_operands = 1 : i64, tpu.core_type = #tpu.core_type<tc>, window_params = [{transform_indices = @transform_0, window_bounds = array<i64: 24, 48>}, {transform_indices = @transform_1, window_bounds = array<i64: 1, 48>}, {transform_indices = @transform_2, window_bounds = array<i64: 1, 48>}, {transform_indices = @transform_3, window_bounds = array<i64: 48, 128>}, {transform_indices = @transform_4, window_bounds = array<i64: 1, 128>}, {transform_indices = @transform_5, window_bounds = array<i64: 24, 128>}, {transform_indices = @transform_6, window_bounds = array<i64: 24, 128>}, {transform_indices = @transform_7, window_bounds = array<i64: 24, 48>}]} {
    %c0_i32 = arith.constant 0 : i32
    %0 = arith.cmpi eq, %arg2, %c0_i32 : i32
    %1 = arith.extui %0 : i1 to i32
    %c0_i32_0 = arith.constant 0 : i32
    %2 = arith.cmpi ne, %1, %c0_i32_0 : i32
    scf.if %2 {
      %cst_21 = arith.constant 0.000000e+00 : f32
      %38 = vector.broadcast %cst_21 : f32 to vector<24x128xf32>
      %c0_22 = arith.constant 0 : index
      %c0_23 = arith.constant 0 : index
      %39 = vector.load %arg11[%c0_22, %c0_23] : memref<24x128xf32, #tpu.memory_space<vmem>>, vector<24x128xf32>
      tpu.vector_store %arg11[%c0_22, %c0_23], %38 {strides = array<i32>} : memref<24x128xf32, #tpu.memory_space<vmem>>, vector<24x128xf32>,
    } else {
    }
    %c0 = arith.constant 0 : index
    %c0_1 = arith.constant 0 : index
    %3 = vector.load %arg3[%c0, %c0_1] : memref<24x48xf32, #tpu.memory_space<vmem>>, vector<24x48xf32>
    %cst = arith.constant dense<0.000000e+00> : vector<24xf32>
    %4 = vector.multi_reduction <add>, %3, %cst [1] : vector<24x48xf32> to vector<24xf32>
    %5 = vector.shape_cast %4 : vector<24xf32> to vector<24x1xf32>
    %cst_2 = arith.constant 4.800000e+01 : f32
    %6 = vector.broadcast %cst_2 : f32 to vector<24x1xf32>
    %7 = arith.divf %5, %6 : vector<24x1xf32>
    %8 = vector.broadcast %7 : vector<24x1xf32> to vector<24x48xf32>
    %9 = arith.subf %3, %8 : vector<24x48xf32>
    %10 = arith.mulf %9, %9 : vector<24x48xf32>
    %cst_3 = arith.constant dense<0.000000e+00> : vector<24xf32>
    %11 = vector.multi_reduction <add>, %10, %cst_3 [1] : vector<24x48xf32> to vector<24xf32>
    %12 = vector.shape_cast %11 : vector<24xf32> to vector<24x1xf32>
    %cst_4 = arith.constant 4.800000e+01 : f32
    %13 = vector.broadcast %cst_4 : f32 to vector<24x1xf32>
    %14 = arith.divf %12, %13 : vector<24x1xf32>
    %15 = vector.broadcast %7 : vector<24x1xf32> to vector<24x48xf32>
    %16 = arith.subf %3, %15 : vector<24x48xf32>
    %cst_5 = arith.constant 9.99999974E-6 : f32
    %17 = vector.broadcast %cst_5 : f32 to vector<24x1xf32>
    %18 = arith.addf %14, %17 : vector<24x1xf32>
    %19 = math.rsqrt %18 : vector<24x1xf32>
    %20 = vector.broadcast %19 : vector<24x1xf32> to vector<24x48xf32>
    %21 = arith.mulf %16, %20 : vector<24x48xf32>
    %c0_6 = arith.constant 0 : index
    %c0_7 = arith.constant 0 : index
    %22 = vector.load %arg4[%c0_6, %c0_7] : memref<1x48xf32, #tpu.memory_space<vmem>>, vector<1x48xf32>
    %23 = vector.broadcast %22 : vector<1x48xf32> to vector<24x48xf32>
    %24 = arith.mulf %21, %23 : vector<24x48xf32>
    %c0_8 = arith.constant 0 : index
    %c0_9 = arith.constant 0 : index
    %25 = vector.load %arg5[%c0_8, %c0_9] : memref<1x48xf32, #tpu.memory_space<vmem>>, vector<1x48xf32>
    %26 = vector.broadcast %25 : vector<1x48xf32> to vector<24x48xf32>
    %27 = arith.addf %24, %26 : vector<24x48xf32>
    %c0_10 = arith.constant 0 : index
    %c0_11 = arith.constant 0 : index
    %28 = vector.load %arg10[%c0_10, %c0_11] : memref<24x48xf32, #tpu.memory_space<vmem>>, vector<24x48xf32>
    tpu.vector_store %arg10[%c0_10, %c0_11], %27 {strides = array<i32>} : memref<24x48xf32, #tpu.memory_space<vmem>>, vector<24x48xf32>,
    %c0_12 = arith.constant 0 : index
    %c0_13 = arith.constant 0 : index
    %29 = vector.load %arg11[%c0_12, %c0_13] : memref<24x128xf32, #tpu.memory_space<vmem>>, vector<24x128xf32>
    %30 = arith.truncf %27 : vector<24x48xf32> to vector<24x48xbf16>
    %c0_14 = arith.constant 0 : index
    %c0_15 = arith.constant 0 : index
    %31 = vector.load %arg6[%c0_14, %c0_15] : memref<48x128xbf16, #tpu.memory_space<vmem>>, vector<48x128xbf16>
    %cst_16 = arith.constant dense<0.000000e+00> : vector<24x128xf32>
    %32 = tpu.matmul %30, %31, %cst_16 {dimension_numbers = #tpu.dot_dimension_numbers<[1], [0], [0], [1], [0, 0, 1, 1], [], []>} : vector<24x48xbf16>, vector<48x128xbf16>, vector<24x128xf32> -> vector<24x128xf32>
    %33 = arith.addf %29, %32 : vector<24x128xf32>
    %c0_17 = arith.constant 0 : index
    %c0_18 = arith.constant 0 : index
    %34 = vector.load %arg11[%c0_17, %c0_18] : memref<24x128xf32, #tpu.memory_space<vmem>>, vector<24x128xf32>
    tpu.vector_store %arg11[%c0_17, %c0_18], %33 {strides = array<i32>} : memref<24x128xf32, #tpu.memory_space<vmem>>, vector<24x128xf32>,
    %c0_i32_19 = arith.constant 0 : i32
    %35 = arith.cmpi eq, %arg2, %c0_i32_19 : i32
    %36 = arith.extui %35 : i1 to i32
    %c0_i32_20 = arith.constant 0 : i32
    %37 = arith.cmpi ne, %36, %c0_i32_20 : i32
    scf.if %37 {
      %c0_21 = arith.constant 0 : index
      %c0_22 = arith.constant 0 : index
      %38 = vector.load %arg11[%c0_21, %c0_22] : memref<24x128xf32, #tpu.memory_space<vmem>>, vector<24x128xf32>
      %c0_23 = arith.constant 0 : index
      %c0_24 = arith.constant 0 : index
      %39 = vector.load %arg7[%c0_23, %c0_24] : memref<1x128xf32, #tpu.memory_space<vmem>>, vector<1x128xf32>
      %40 = vector.broadcast %39 : vector<1x128xf32> to vector<24x128xf32>
      %41 = arith.addf %38, %40 : vector<24x128xf32>
      %c0_25 = arith.constant 0 : index
      %c0_26 = arith.constant 0 : index
      %42 = vector.load %arg8[%c0_25, %c0_26] : memref<24x128xf32, #tpu.memory_space<vmem>>, vector<24x128xf32>
      %43 = arith.addf %41, %42 : vector<24x128xf32>
      %cst_27 = arith.constant 0.000000e+00 : f32
      %44 = vector.broadcast %cst_27 : f32 to vector<24x128xf32>
      %45 = arith.maximumf %43, %44 : vector<24x128xf32>
      %c0_28 = arith.constant 0 : index
      %c0_29 = arith.constant 0 : index
      %46 = vector.load %arg9[%c0_28, %c0_29] : memref<24x128xf32, #tpu.memory_space<vmem>>, vector<24x128xf32>
      tpu.vector_store %arg9[%c0_28, %c0_29], %45 {strides = array<i32>} : memref<24x128xf32, #tpu.memory_space<vmem>>, vector<24x128xf32>,
    } else {
    }
    return
  }
  func.func @transform_0(%arg0: i32, %arg1: i32, %arg2: i32) -> (i32, i32) {
    %c0_i32 = arith.constant 0 : i32
    return %arg0, %arg2 : i32, i32
  }
  func.func @transform_1(%arg0: i32, %arg1: i32, %arg2: i32) -> (i32, i32) {
    %c0_i32 = arith.constant 0 : i32
    %c0_i32_0 = arith.constant 0 : i32
    return %c0_i32, %arg2 : i32, i32
  }
  func.func @transform_2(%arg0: i32, %arg1: i32, %arg2: i32) -> (i32, i32) {
    %c0_i32 = arith.constant 0 : i32
    %c0_i32_0 = arith.constant 0 : i32
    return %c0_i32, %arg2 : i32, i32
  }
  func.func @transform_3(%arg0: i32, %arg1: i32, %arg2: i32) -> (i32, i32) {
    %c0_i32 = arith.constant 0 : i32
    return %arg2, %arg1 : i32, i32
  }
  func.func @transform_4(%arg0: i32, %arg1: i32, %arg2: i32) -> (i32, i32) {
    %c0_i32 = arith.constant 0 : i32
    %c0_i32_0 = arith.constant 0 : i32
    return %c0_i32, %arg1 : i32, i32
  }
  func.func @transform_5(%arg0: i32, %arg1: i32, %arg2: i32) -> (i32, i32) {
    %c0_i32 = arith.constant 0 : i32
    return %arg0, %arg1 : i32, i32
  }
  func.func @transform_6(%arg0: i32, %arg1: i32, %arg2: i32) -> (i32, i32) {
    %c0_i32 = arith.constant 0 : i32
    return %arg0, %arg1 : i32, i32
  }
  func.func @transform_7(%arg0: i32, %arg1: i32, %arg2: i32) -> (i32, i32) {
    %c0_i32 = arith.constant 0 : i32
    %c0_i32_0 = arith.constant 0 : i32
    return %arg0, %c0_i32 : i32, i32
  }
}

</mosaic_0001>

<llo_original>
// kernel: tpu_custom_call.1
$region0: #{tpu_custom_call.1}
  #allocation0 [shape = 'u32[]', space=smem, size = 0x4, offset = 0x4, fixed_abs, tag = 'smem constant byte address 0x4 - core index']
  #allocation1 [shape = 'u32[144,128]{1,0:T(1,128)}', space=vmem, size = 0x12000, scoped, tag = 'internal scratch']
  #allocation2 [shape = 'f32[24,128]{1,0:T(8,128)}', space=vmem, size = 0x3000, scoped, tag = 'scratch operand']
  %s0 = inlined_call_operand.hbm [shape: f32[24,48], index: 0, kind: input, shape index: {}]
  %s1 = inlined_call_operand.vmem [shape: f32[1,48], index: 1, kind: input, shape index: {}]
  %s2 = inlined_call_operand.vmem [shape: f32[1,48], index: 2, kind: input, shape index: {}]
  %s3 = inlined_call_operand.hbm [shape: bf16[48,128], index: 3, kind: input, shape index: {}]
  %s4 = inlined_call_operand.vmem [shape: f32[1,128], index: 4, kind: input, shape index: {}]
  %s5 = inlined_call_operand.hbm [shape: f32[24,128], index: 5, kind: input, shape index: {}]
  %s6 = inlined_call_operand.hbm [shape: f32[24,128], index: 6, kind: output, shape index: {0}]
  %s7 = inlined_call_operand.hbm [shape: f32[24,48], index: 7, kind: output, shape index: {1}]
  %8 = xla_tuple %s6, %s7
  %s9 = sld [smem:[#allocation0]]
  $region62: #{tpu_custom_call.1} parent=0
    _
  %s11 = ssub.s32 1, %s9
  %s12 = scalar_select 0, %s11, %s9
  $region1: #{tpu_custom_call.1} parent=0
    #allocation3 [shape = 'u8[12288]{0}', space=vmem, size = 0x3000, scoped, tag = 'input window, operand 0, single buffered']
    #allocation4 [shape = 's32[1]{0}', space=sflag, size = 0x4, scoped, tag = 'scoped memory for tpu_custom_call.1']
    #allocation5 [shape = 's32[1]{0}', space=sflag, size = 0x4, scoped, tag = 'scoped memory for tpu_custom_call.1']
    #allocation6 [shape = 'u8[12288]{0}', space=vmem, size = 0x3000, scoped, tag = 'input window, operand 3, single buffered']
    #allocation7 [shape = 's32[1]{0}', space=sflag, size = 0x4, scoped, tag = 'scoped memory for tpu_custom_call.1']
    #allocation8 [shape = 'u8[12288]{0}', space=vmem, size = 0x3000, scoped, tag = 'input window, operand 5, single buffered']
    #allocation9 [shape = 'u8[12288]{0}', space=vmem, size = 0x3000, scoped, tag = 'output window, operand 0, single buffered']
    #allocation10 [shape = 'u8[12288]{0}', space=vmem, size = 0x3000, scoped, tag = 'output window, operand 1, single buffered']
    #allocation11 [shape = 's32[1]{0}', space=sflag, size = 0x4, scoped, tag = 'scoped memory for tpu_custom_call.1']
    %13 = vsyncpa [#allocation4], 0
    %14 = vsyncpa [#allocation7], 0
    %15 = vsyncpa [#allocation5], 0
    %16 = vsyncpa [#allocation11], 0
    // Predicated region
    $region2: #{tpu_custom_call.1} parent=1 // pred_check
      _
    $region3: #{tpu_custom_call.1} parent=1 // pred_check_branch
      %18 = sbr.rel (0) target = $region5
    $region4: #{tpu_custom_call.1} parent=1 // pred_region
      %s20 = ssub.s32 384, 384
      %21 = vsyncadd [#allocation4], %s20
      %s22 = sshll.u32 [#allocation3], 4
      %s23 = int_to_ptr.vmem [resolvable:$true] %s22
      %28 = dma.hbm_to_vmem [thread:$0]  %s0, 384, %s23, [#allocation4], 128, 128, 8
    $region5: #{tpu_custom_call.1} parent=1 // pred_fallthru
      _
    // Predicated region
    $region6: #{tpu_custom_call.1} parent=1 // pred_check
      _
    $region7: #{tpu_custom_call.1} parent=1 // pred_check_branch
      %30 = sbr.rel (0) target = $region9
    $region8: #{tpu_custom_call.1} parent=1 // pred_region
      _
    $region9: #{tpu_custom_call.1} parent=1 // pred_fallthru
      _
    // Predicated region
    $region10: #{tpu_custom_call.1} parent=1 // pred_check
      _
    $region11: #{tpu_custom_call.1} parent=1 // pred_check_branch
      %32 = sbr.rel (0) target = $region13
    $region12: #{tpu_custom_call.1} parent=1 // pred_region
      _
    $region13: #{tpu_custom_call.1} parent=1 // pred_fallthru
      _
    // Predicated region
    $region14: #{tpu_custom_call.1} parent=1 // pred_check
      _
    $region15: #{tpu_custom_call.1} parent=1 // pred_check_branch
      %34 = sbr.rel (0) target = $region17
    $region16: #{tpu_custom_call.1} parent=1 // pred_region
      %s36 = ssub.s32 384, 384
      %37 = vsyncadd [#allocation7], %s36
      %s38 = sshll.u32 [#allocation6], 4
      %s39 = int_to_ptr.vmem [resolvable:$true] %s38
      %44 = dma.hbm_to_vmem [thread:$0]  %s3, 384, %s39, [#allocation7], 64, 64, 4
    $region17: #{tpu_custom_call.1} parent=1 // pred_fallthru
      _
    // Predicated region
    $region18: #{tpu_custom_call.1} parent=1 // pred_check
      _
    $region19: #{tpu_custom_call.1} parent=1 // pred_check_branch
      %46 = sbr.rel (0) target = $region21
    $region20: #{tpu_custom_call.1} parent=1 // pred_region
      _
    $region21: #{tpu_custom_call.1} parent=1 // pred_fallthru
      _
    // Predicated region
    $region22: #{tpu_custom_call.1} parent=1 // pred_check
      _
    $region23: #{tpu_custom_call.1} parent=1 // pred_check_branch
      %48 = sbr.rel (0) target = $region25
    $region24: #{tpu_custom_call.1} parent=1 // pred_region
      %s50 = ssub.s32 384, 384
      %51 = vsyncadd [#allocation7], %s50
      %s52 = sshll.u32 [#allocation8], 4
      %s53 = int_to_ptr.vmem [resolvable:$true] %s52
      %58 = dma.hbm_to_vmem [thread:$0]  %s5, 384, %s53, [#allocation7], 128, 128, 8
    $region25: #{tpu_custom_call.1} parent=1 // pred_fallthru
      _
    // Predicated region
    $region26: #{tpu_custom_call.1} parent=1 // pred_check
      _
    $region27: #{tpu_custom_call.1} parent=1 // pred_check_branch
      %60 = sbr.rel (0) target = $region29
    $region28: #{tpu_custom_call.1} parent=1 // pred_region
      %61 = dma.done [#allocation4], 384
    $region29: #{tpu_custom_call.1} parent=1 // pred_fallthru
      _
    // Predicated region
    $region30: #{tpu_custom_call.1} parent=1 // pred_check
      _
    $region31: #{tpu_custom_call.1} parent=1 // pred_check_branch
      %63 = sbr.rel (0) target = $region33
    $region32: #{tpu_custom_call.1} parent=1 // pred_region
      %64 = dma.done [#allocation7], 384
    $region33: #{tpu_custom_call.1} parent=1 // pred_fallthru
      _
    // Predicated region
    $region34: #{tpu_custom_call.1} parent=1 // pred_check
      _
    $region35: #{tpu_custom_call.1} parent=1 // pred_check_branch
      %66 = sbr.rel (0) target = $region37
    $region36: #{tpu_custom_call.1} parent=1 // pred_region
      %67 = dma.done [#allocation7], 384
    $region37: #{tpu_custom_call.1} parent=1 // pred_fallthru
      _
    %p69 = scmp.eq.s32.totalorder 0, 0
    // Predicated region
    $region38: #{tpu_custom_call.1} parent=1 // pred_check
      %p70 = pneg %p69
    $region39: #{tpu_custom_call.1} parent=1 // pred_check_branch
      %72 = sbr.rel (%p70) target = $region41
    $region40: #{tpu_custom_call.1} parent=1 // pred_region
      %73 = vst [vmem:[#allocation2] sm:$0xff] 0.0
      %74 = vst [vmem:[#allocation2 + $0x8] sm:$0xff] 0.0
      %75 = vst [vmem:[#allocation2 + $0x10] sm:$0xff] 0.0
    $region41: #{tpu_custom_call.1} parent=1 // pred_fallthru
      _
    %v76 = vld [vmem:[#allocation3] sm:$0xff]
    %v77 = vld [vmem:[#allocation3 + $0x8] sm:$0xff]
    %v78 = vld [vmem:[#allocation3 + $0x10] sm:$0xff]
    %vm79 = vcmask 392192
    %v80 = vsel %vm79, %v76, 0.0
    %81 = vadd.xlane.f32.xlu0 %v80
    %v82 = vpop.xlane.xlu0 %81
    %v83 = vsel %vm79, %v77, 0.0
    %84 = vadd.xlane.f32.xlu0 %v83
    %v85 = vpop.xlane.xlu0 %84
    %v86 = vsel %vm79, %v78, 0.0
    %87 = vadd.xlane.f32.xlu0 %v86
    %v88 = vpop.xlane.xlu0 %87
    %v89 = vrcp.pop 48.0
    %v90 = vmul.f32 %v82, %v89
    %v91 = vmul.f32 %v85, %v89
    %v92 = vmul.f32 %v88, %v89
    %v93 = vsub.f32 %v76, %v90
    %v94 = vsub.f32 %v77, %v91
    %v95 = vsub.f32 %v78, %v92
    %v96 = vmul.f32 %v93, %v93
    %v97 = vmul.f32 %v94, %v94
    %v98 = vmul.f32 %v95, %v95
    %v99 = vsel %vm79, %v96, 0.0
    %100 = vadd.xlane.f32.xlu0 %v99
    %v101 = vpop.xlane.xlu0 %100
    %v102 = vsel %vm79, %v97, 0.0
    %103 = vadd.xlane.f32.xlu0 %v102
    %v104 = vpop.xlane.xlu0 %103
    %v105 = vsel %vm79, %v98, 0.0
    %106 = vadd.xlane.f32.xlu0 %v105
    %v107 = vpop.xlane.xlu0 %106
    %v108 = vmul.f32 %v101, %v89
    %v109 = vmul.f32 %v104, %v89
    %v110 = vmul.f32 %v107, %v89
    %v111 = vadd.f32 %v108, 1e-05
    %v112 = vadd.f32 %v109, 1e-05
    %v113 = vadd.f32 %v110, 1e-05
    %v114 = vrsqrt.pop %v111
    %v115 = vrsqrt.pop %v112
    %v116 = vrsqrt.pop %v113
    %v117 = vmul.f32 %v93, %v114
    %v118 = vmul.f32 %v94, %v115
    %v119 = vmul.f32 %v95, %v116
    %v120 = vld [vmem:[%s1] sm:$0x1]
    %v122 = vlaneseq
    %v123 = vshrl.u32 %v122, 7
    %v124 = vsub.s32 0, %v123
    %v125 = vrot.slane %v120, %v124
    %v127 = vmul.f32 %v117, %v125
    %v128 = vmul.f32 %v118, %v125
    %v129 = vmul.f32 %v119, %v125
    %v130 = vld [vmem:[%s2] sm:$0x1]
    %v132 = vlaneseq
    %v133 = vshrl.u32 %v132, 7
    %v134 = vsub.s32 0, %v133
    %v135 = vrot.slane %v130, %v134
    %v137 = vadd.f32 %v127, %v135
    %v138 = vadd.f32 %v128, %v135
    %v139 = vadd.f32 %v129, %v135
    %140 = vst.msk [vmem:[#allocation10] sm:$0xff] %vm79, %v137
    %141 = vst.msk [vmem:[#allocation10 + $0x8] sm:$0xff] %vm79, %v138
    %142 = vst.msk [vmem:[#allocation10 + $0x10] sm:$0xff] %vm79, %v139
    %v143 = vld [vmem:[#allocation2] sm:$0xff]
    %v144 = vld [vmem:[#allocation2 + $0x8] sm:$0xff]
    %v145 = vld [vmem:[#allocation2 + $0x10] sm:$0xff]
    %v146 = vpack.c.bf16 %v138, %v137
    %v147 = vpack.c.bf16 %v139, %v139
    %v148 = vld [vmem:[#allocation6] sm:$0xf]
    %v149 = vld [vmem:[#allocation6 + $0x4] sm:$0xf]
    %v150 = vld [vmem:[#allocation6 + $0x8] sm:$0xf]
    %v151 = vld [vmem:[#allocation6 + $0xc] sm:$0xf]
    %v152 = vld [vmem:[#allocation6 + $0x10] sm:$0xf]
    %v153 = vld [vmem:[#allocation6 + $0x14] sm:$0xf]
    %v160 = vunpack.c.l.b16 %v148
    %v161 = vunpack.c.l.b16 %v149
    %v162 = vunpack.c.l.b16 %v150
    %v163 = vunpack.c.l.b16 %v151
    %v164 = vunpack.c.l.b16 %v152
    %v165 = vunpack.c.l.b16 %v153
    %v166 = vpack.c.b16 %v161, %v160
    %v167 = vpack.c.b16 %v163, %v162
    %v168 = vpack.c.b16 %v165, %v164
    %v173 = vsel %vm79, %v146, 0
    %v176 = vsel %vm79, %v147, 0
    %178 = vmatprep.subr.bf16.mxu0 0
    %179 = vmatpush1.bf16.msra.mxu0 0
    %180 = vmatprep.subr.bf16.mxu0 0
    %181 = vmatpush1.bf16.msra.mxu0 0
    %182 = vmatprep.subr.bf16.mxu0 0
    %183 = vmatpush1.bf16.msra.mxu0 0
    %184 = vmatprep.subr.bf16.mxu0 0
    %185 = vmatpush1.bf16.msra.mxu0 0
    %186 = vmatprep.subr.bf16.mxu0 0
    %187 = vmatpush1.bf16.msra.mxu0 0
    %188 = vmatprep.subr.bf16.mxu0 0
    %189 = vmatpush1.bf16.msra.mxu0 %v168
    %190 = vmatprep.subr.bf16.mxu0 0
    %191 = vmatpush1.bf16.msra.mxu0 %v167
    %192 = vmatprep.subr.bf16.mxu0 0
    %193 = vmatpush1.bf16.msra.mxu0 %v166
    %194 = vmatprep.subr.bf16.mxu0 0
    %195 = vmatpush2.bf16.msra.mxu0 0
    %196 = vmatprep.subr.bf16.mxu0 0
    %197 = vmatpush2.bf16.msra.mxu0 0
    %198 = vmatprep.subr.bf16.mxu0 0
    %199 = vmatpush2.bf16.msra.mxu0 0
    %200 = vmatprep.subr.bf16.mxu0 0
    %201 = vmatpush2.bf16.msra.mxu0 0
    %202 = vmatprep.subr.bf16.mxu0 0
    %203 = vmatpush2.bf16.msra.mxu0 0
    %204 = vmatprep.subr.bf16.mxu0 0
    %205 = vmatpush2.bf16.msra.mxu0 0
    %206 = vmatprep.subr.bf16.mxu0 0
    %207 = vmatpush2.bf16.msra.mxu0 0
    %208 = vmatprep.subr.bf16.mxu0 0
    %209 = vmatpush2.bf16.msra.mxu0 0
    %210 = vmatprep.mubr.bf16.mxu0 0
    %211 = vmatmul.mubr.bf16.gmra.mxu0 %v173
    %v212 = vpop.f32.mrf.mxu0
    %v213 = vadd.f32 0.0, %v212
    %v214 = vpop.f32.mrf.mxu0
    %v215 = vpop.f32.mrf.mxu0
    %v216 = vadd.f32 0.0, %v215
    %v217 = vpop.f32.mrf.mxu0
    %218 = vmatprep.mubr.bf16.mxu0 0
    %219 = vmatmul.mubr.bf16.gmra.mxu0 %v176
    %v220 = vpop.f32.mrf.mxu0
    %v221 = vadd.f32 0.0, %v220
    %v222 = vpop.f32.mrf.mxu0
    %v223 = vpop.f32.mrf.mxu0
    %v224 = vpop.f32.mrf.mxu0
    %225 = vdwg.mxu0
    %v226 = vadd.f32 %v143, %v213
    %v227 = vadd.f32 %v144, %v216
    %v228 = vadd.f32 %v145, %v221
    %229 = vst [vmem:[#allocation2] sm:$0xff] %v226
    %230 = vst [vmem:[#allocation2 + $0x8] sm:$0xff] %v227
    %231 = vst [vmem:[#allocation2 + $0x10] sm:$0xff] %v228
    // Predicated region
    $region42: #{tpu_custom_call.1} parent=1 // pred_check
      %p232 = pneg %p69
    $region43: #{tpu_custom_call.1} parent=1 // pred_check_branch
      %234 = sbr.rel (%p232) target = $region45
    $region44: #{tpu_custom_call.1} parent=1 // pred_region
      %v235 = vld [vmem:[#allocation2] sm:$0xff]
      %v236 = vld [vmem:[#allocation2 + $0x8] sm:$0xff]
      %v237 = vld [vmem:[#allocation2 + $0x10] sm:$0xff]
      %v238 = vld [vmem:[%s4] sm:$0x1]
      %v240 = vlaneseq
      %v241 = vshrl.u32 %v240, 7
      %v242 = vsub.s32 0, %v241
      %v243 = vrot.slane %v238, %v242
      %v245 = vadd.f32 %v235, %v243
      %v246 = vadd.f32 %v236, %v243
      %v247 = vadd.f32 %v237, %v243
      %v248 = vld [vmem:[#allocation8] sm:$0xff]
      %v249 = vld [vmem:[#allocation8 + $0x8] sm:$0xff]
      %v250 = vld [vmem:[#allocation8 + $0x10] sm:$0xff]
      %v251 = vadd.f32 %v245, %v248
      %v252 = vadd.f32 %v246, %v249
      %v253 = vadd.f32 %v247, %v250
      %v254 = vmax.f32 %v251, 0.0
      %v255 = vmax.f32 %v252, 0.0
      %v256 = vmax.f32 %v253, 0.0
      %257 = vst [vmem:[#allocation9] sm:$0xff] %v254
      %258 = vst [vmem:[#allocation9 + $0x8] sm:$0xff] %v255
      %259 = vst [vmem:[#allocation9 + $0x10] sm:$0xff] %v256
    $region45: #{tpu_custom_call.1} parent=1 // pred_fallthru
      _
    // Predicated region
    $region46: #{tpu_custom_call.1} parent=1 // pred_check
      _
    $region47: #{tpu_custom_call.1} parent=1 // pred_check_branch
      %261 = sbr.rel (0) target = $region49
    $region48: #{tpu_custom_call.1} parent=1 // pred_region
      %s263 = ssub.s32 384, 384
      %264 = vsyncadd [#allocation5], %s263
      %s265 = sshll.u32 [#allocation9], 4
      %s266 = int_to_ptr.vmem [resolvable:$true] %s265
      %271 = dma.vmem_to_hbm [thread:$0]  %s266, 384, %s6, [#allocation5], 128, 128, 8
    $region49: #{tpu_custom_call.1} parent=1 // pred_fallthru
      _
    // Predicated region
    $region50: #{tpu_custom_call.1} parent=1 // pred_check
      _
    $region51: #{tpu_custom_call.1} parent=1 // pred_check_branch
      %273 = sbr.rel (0) target = $region53
    $region52: #{tpu_custom_call.1} parent=1 // pred_region
      %s275 = ssub.s32 384, 384
      %276 = vsyncadd [#allocation11], %s275
      %s277 = sshll.u32 [#allocation10], 4
      %s278 = int_to_ptr.vmem [resolvable:$true] %s277
      %283 = dma.vmem_to_hbm [thread:$0]  %s278, 384, %s7, [#allocation11], 128, 128, 8
    $region53: #{tpu_custom_call.1} parent=1 // pred_fallthru
      _
    // Predicated region
    $region54: #{tpu_custom_call.1} parent=1 // pred_check
      _
    $region55: #{tpu_custom_call.1} parent=1 // pred_check_branch
      %285 = sbr.rel (0) target = $region57
    $region56: #{tpu_custom_call.1} parent=1 // pred_region
      %286 = dma.done [#allocation5], 384
    $region57: #{tpu_custom_call.1} parent=1 // pred_fallthru
      _
    // Predicated region
    $region58: #{tpu_custom_call.1} parent=1 // pred_check
      _
    $region59: #{tpu_custom_call.1} parent=1 // pred_check_branch
      %288 = sbr.rel (0) target = $region61
    $region60: #{tpu_custom_call.1} parent=1 // pred_region
      %289 = dma.done [#allocation11], 384
    $region61: #{tpu_custom_call.1} parent=1 // pred_fallthru
      _
    %290 = vsyncpa [#allocation4], 1
    %291 = vsyncpa [#allocation7], 1
    %292 = vsyncpa [#allocation5], 1
    %293 = vsyncpa [#allocation11], 1

</llo_original>
